<compile_context>
chip_gen: v5e
topology: v5e:2x2
jax: 0.10.0
libtpu: 0.0.40
codegen_flags: <defaults>
</compile_context>

<pallas_src>
import math

import jax
import jax.numpy as jnp
from jax.experimental import pallas as pl
from jax.experimental.pallas import tpu as pltpu

_EPS = 1e-7
_LANES = 128


def _make_cce_kernel(*, rows, tile_r, lanes, n_inner, need_mask):
    def cce_kernel(pred_ref, true_ref, out_ref):
        outer = pl.program_id(0)
        inner = pl.program_id(1)

        @pl.when(inner == 0)
        def _init():
            out_ref[...] = jnp.zeros_like(out_ref)

        p = pred_ref[...].astype(jnp.float32)
        t = true_ref[...].astype(jnp.float32)

        if need_mask:
            # Logical (unclamped) global row of every element in this tile. Rows
            # past `rows` (partial last block / duplicated clamped overshoot
            # blocks) are removed from the reduction.
            grow = (outer * n_inner + inner) * tile_r + jax.lax.broadcasted_iota(
                jnp.int32, (tile_r, lanes), 0)
            valid = grow < rows
            t = jnp.where(valid, t, 0.0)
            p = jnp.where(valid, p, 1.0)

        p = jnp.clip(p, _EPS, 1.0)
        contrib = t * jnp.log(p)  # EUP log + VPU mul
        # Sublane-group partial reduce (tile_r, lanes) -> (8, lanes): pure
        # cross-vreg VPU adds, no per-step cross-lane (XLU) reduction.
        out_ref[...] += contrib.reshape(tile_r // 8, 8, lanes).sum(axis=0)

    return cce_kernel


def categorical_crossentropy(y_pred, y_true, *, max_tile_rows=2048,
                             max_parallel_chunks=2):
    """
    y_pred: (N, C, *spatial) float probabilities (e.g. softmax over axis=1).
    y_true: (N, C, *spatial) one-hot / soft targets, same shape.
    Returns a scalar float32 loss (mean over N * prod(spatial) voxels of the
    channel-wise crossentropy).
    """
    assert y_pred.shape == y_true.shape
    assert y_pred.ndim >= 2, "expected (N, C, ...) inputs"
    total = math.prod(y_pred.shape)
    n_channels = y_pred.shape[1]
    n_samples = total // n_channels  # N * prod(spatial)

    pred_flat = y_pred.reshape(-1)
    true_flat = y_true.reshape(-1)

    # Pad the flat length to a multiple of 8*128 so the slab is (8k, 128).
    # Padding contributes nothing (true = 0, log(1) = 0) and is a no-op (no copy)
    # whenever total is already a multiple of 1024.
    pad = (-total) % (8 * _LANES)
    if pad:
        pred_flat = jnp.pad(pred_flat, (0, pad), constant_values=1)
        true_flat = jnp.pad(true_flat, (0, pad), constant_values=0)

    rows = (total + pad) // _LANES  # multiple of 8
    pred2d = pred_flat.reshape(rows, _LANES)
    true2d = true_flat.reshape(rows, _LANES)

    # Row tile: multiple of 8, <= rows, ~1 MiB (f32) per input per pipeline
    # buffer -> 2 inputs x 2 buffers x 1 MiB = 4 MiB resident on every chip gen.
    tile_r = max(8, (min(max_tile_rows, rows) // 8) * 8)
    n_row_blocks = pl.cdiv(rows, tile_r)

    # Outer "parallel" axis: on v7x both TensorCores pull their own half of the
    # rows from HBM; on single-core chips (v5e/v6e) it is a harmless loop split.
    n_outer = max_parallel_chunks if n_row_blocks >= 2 * max_parallel_chunks else 1
    n_inner = pl.cdiv(n_row_blocks, n_outer)
    need_mask = (n_outer * n_inner * tile_r) > rows

    def in_index_map(o, i):
        # Clamp so the (masked-out) overshoot blocks never DMA out of bounds.
        return (jnp.minimum(o * n_inner + i, n_row_blocks - 1), 0)

    kernel = _make_cce_kernel(rows=rows, tile_r=tile_r, lanes=_LANES,
                              n_inner=n_inner, need_mask=need_mask)

    bytes_in = (pred2d.size * pred2d.dtype.itemsize
                + true2d.size * true2d.dtype.itemsize)
    cost = pl.CostEstimate(flops=4 * total, transcendentals=total,
                           bytes_accessed=bytes_in + n_outer * 8 * _LANES * 4)

    partial = pl.pallas_call(
        kernel,
        out_shape=jax.ShapeDtypeStruct((n_outer * 8, _LANES), jnp.float32),
        grid=(n_outer, n_inner),
        in_specs=[
            pl.BlockSpec((tile_r, _LANES), in_index_map),
            pl.BlockSpec((tile_r, _LANES), in_index_map),
        ],
        out_specs=pl.BlockSpec((8, _LANES), lambda o, i: (o, 0)),
        compiler_params=pltpu.CompilerParams(
            dimension_semantics=("parallel", "arbitrary")),
        cost_estimate=cost,
    )(pred2d, true2d)

    # Tiny epilogue: one cross-lane reduce over the (n_outer*8, 128) partials.
    return -jnp.sum(partial) / jnp.float32(n_samples)


def _reference(y_pred, y_true):
    p = jnp.clip(y_pred.astype(jnp.float32), _EPS, 1.0)
    t = y_true.astype(jnp.float32)
    per_voxel = -jnp.sum(t * jnp.log(p), axis=1)  # sum over channel axis
    return jnp.mean(per_voxel)


if __name__ == "__main__":
    key = jax.random.PRNGKey(0)
    k1, k2, k3, k4 = jax.random.split(key, 4)

    # --- Test 1: small NCHW f32 (single tile, grid (1, 1)) -------------------
    N, C, H, W = 2, 4, 16, 16
    logits = jax.random.normal(k1, (N, C, H, W), dtype=jnp.float32)
    y_pred = jax.nn.softmax(logits, axis=1)
    labels = jax.random.randint(k2, (N, H, W), 0, C)
    y_true = jax.nn.one_hot(labels, C, axis=1, dtype=jnp.float32)

    loss = jax.block_until_ready(categorical_crossentropy(y_pred, y_true))
    ref = _reference(y_pred, y_true)
    assert jnp.allclose(loss, ref, rtol=1e-5, atol=1e-5), (loss, ref)

    # --- Test 2: bf16 inputs, odd size -> exercises the in-kernel cast, tail
    # padding, the tiled reduction grid, the partial-block mask and the 2-way
    # parallel outer axis (forced small tiles to hit every path) --------------
    N2, C2, H2, W2 = 2, 4, 25, 45  # total = 9000 (not a multiple of 1024)
    logits2 = jax.random.normal(k3, (N2, C2, H2, W2), dtype=jnp.float32)
    y_pred2 = jax.nn.softmax(logits2, axis=1).astype(jnp.bfloat16)
    labels2 = jax.random.randint(k4, (N2, H2, W2), 0, C2)
    y_true2 = jax.nn.one_hot(labels2, C2, axis=1, dtype=jnp.bfloat16)

    loss2 = jax.block_until_ready(
        categorical_crossentropy(y_pred2, y_true2, max_tile_rows=16))
    ref2 = _reference(y_pred2, y_true2)
    assert jnp.allclose(loss2, ref2, rtol=1e-4, atol=1e-4), (loss2, ref2)

    print("KERNEL_OK")
</pallas_src>

<mosaic_0001>
module attributes {stable_mosaic.version = 11 : i64} {
  func.func @cce_kernel(%arg0: i32, %arg1: i32, %arg2: memref<16x128xf32, #tpu.memory_space<vmem>>, %arg3: memref<16x128xf32, #tpu.memory_space<vmem>>, %arg4: memref<8x128xf32, #tpu.memory_space<vmem>>) attributes {dimension_semantics = [#tpu.dimension_semantics<parallel>, #tpu.dimension_semantics<arbitrary>], iteration_bounds = array<i64: 1, 1>, scalar_prefetch = 0 : i64, scratch_operands = 0 : i64, tpu.core_type = #tpu.core_type<tc>, window_params = [{transform_indices = @transform_0, window_bounds = array<i64: 16, 128>}, {transform_indices = @transform_1, window_bounds = array<i64: 16, 128>}, {transform_indices = @transform_2, window_bounds = array<i64: 8, 128>}]} {
    %c0_i32 = arith.constant 0 : i32
    %0 = arith.cmpi eq, %arg1, %c0_i32 : i32
    %1 = arith.extui %0 : i1 to i32
    %c0_i32_0 = arith.constant 0 : i32
    %2 = arith.cmpi ne, %1, %c0_i32_0 : i32
    scf.if %2 {
      %cst_10 = arith.constant 0.000000e+00 : f32
      %16 = vector.broadcast %cst_10 : f32 to vector<8x128xf32>
      %c0_11 = arith.constant 0 : index
      %c0_12 = arith.constant 0 : index
      %17 = vector.load %arg4[%c0_11, %c0_12] : memref<8x128xf32, #tpu.memory_space<vmem>>, vector<8x128xf32>
      tpu.vector_store %arg4[%c0_11, %c0_12], %16 {strides = array<i32>} : memref<8x128xf32, #tpu.memory_space<vmem>>, vector<8x128xf32>,
    } else {
    }
    %c0 = arith.constant 0 : index
    %c0_1 = arith.constant 0 : index
    %3 = vector.load %arg2[%c0, %c0_1] : memref<16x128xf32, #tpu.memory_space<vmem>>, vector<16x128xf32>
    %c0_2 = arith.constant 0 : index
    %c0_3 = arith.constant 0 : index
    %4 = vector.load %arg3[%c0_2, %c0_3] : memref<16x128xf32, #tpu.memory_space<vmem>>, vector<16x128xf32>
    %cst = arith.constant 1.000000e-07 : f32
    %cst_4 = arith.constant 1.000000e+00 : f32
    %5 = vector.broadcast %cst : f32 to vector<16x128xf32>
    %6 = arith.maximumf %5, %3 : vector<16x128xf32>
    %7 = vector.broadcast %cst_4 : f32 to vector<16x128xf32>
    %8 = arith.minimumf %7, %6 : vector<16x128xf32>
    %9 = math.log %8 : vector<16x128xf32>
    %10 = arith.mulf %4, %9 : vector<16x128xf32>
    %c0_5 = arith.constant 0 : index
    %c0_6 = arith.constant 0 : index
    %11 = vector.load %arg4[%c0_5, %c0_6] : memref<8x128xf32, #tpu.memory_space<vmem>>, vector<8x128xf32>
    %12 = vector.shape_cast %10 : vector<16x128xf32> to vector<2x8x128xf32>
    %cst_7 = arith.constant dense<0.000000e+00> : vector<8x128xf32>
    %13 = vector.multi_reduction <add>, %12, %cst_7 [0] : vector<2x8x128xf32> to vector<8x128xf32>
    %14 = arith.addf %11, %13 : vector<8x128xf32>
    %c0_8 = arith.constant 0 : index
    %c0_9 = arith.constant 0 : index
    %15 = vector.load %arg4[%c0_8, %c0_9] : memref<8x128xf32, #tpu.memory_space<vmem>>, vector<8x128xf32>
    tpu.vector_store %arg4[%c0_8, %c0_9], %14 {strides = array<i32>} : memref<8x128xf32, #tpu.memory_space<vmem>>, vector<8x128xf32>,
    return
  }
  func.func @transform_0(%arg0: i32, %arg1: i32) -> (i32, i32) {
    %c1_i32 = arith.constant 1 : i32
    %0 = arith.muli %arg0, %c1_i32 : i32
    %1 = arith.addi %0, %arg1 : i32
    %c0_i32 = arith.constant 0 : i32
    %2 = arith.minsi %1, %c0_i32 : i32
    %c0_i32_0 = arith.constant 0 : i32
    %c0_i32_1 = arith.constant 0 : i32
    return %2, %c0_i32_0 : i32, i32
  }
  func.func @transform_1(%arg0: i32, %arg1: i32) -> (i32, i32) {
    %c1_i32 = arith.constant 1 : i32
    %0 = arith.muli %arg0, %c1_i32 : i32
    %1 = arith.addi %0, %arg1 : i32
    %c0_i32 = arith.constant 0 : i32
    %2 = arith.minsi %1, %c0_i32 : i32
    %c0_i32_0 = arith.constant 0 : i32
    %c0_i32_1 = arith.constant 0 : i32
    return %2, %c0_i32_0 : i32, i32
  }
  func.func @transform_2(%arg0: i32, %arg1: i32) -> (i32, i32) {
    %c0_i32 = arith.constant 0 : i32
    %c0_i32_0 = arith.constant 0 : i32
    return %arg0, %c0_i32 : i32, i32
  }
}

</mosaic_0001>

<llo_original>
// kernel: tpu_custom_call.1
$region0: #{tpu_custom_call.1}
  #allocation0 [shape = 'u32[]', space=smem, size = 0x4, offset = 0x4, fixed_abs, tag = 'smem constant byte address 0x4 - core index']
  #allocation1 [shape = 'u32[72,128]{1,0:T(1,128)}', space=vmem, size = 0x9000, scoped, tag = 'internal scratch']
  %s0 = inlined_call_operand.hbm [shape: f32[16,128], index: 0, kind: input, shape index: {}]
  %s1 = inlined_call_operand.hbm [shape: f32[16,128], index: 1, kind: input, shape index: {}]
  %s2 = inlined_call_operand.hbm [shape: f32[8,128], index: 2, kind: output, shape index: {}]
  %s3 = sld [smem:[#allocation0]]
  $region30: #{tpu_custom_call.1} parent=0
    _
  %s5 = ssub.s32 1, %s3
  %s6 = scalar_select 0, %s5, %s3
  $region1: #{tpu_custom_call.1} parent=0
    #allocation2 [shape = 'u8[8192]{0}', space=vmem, size = 0x2000, scoped, tag = 'input window, operand 0, single buffered']
    #allocation3 [shape = 's32[1]{0}', space=sflag, size = 0x4, scoped, tag = 'scoped memory for tpu_custom_call.1']
    #allocation4 [shape = 's32[1]{0}', space=sflag, size = 0x4, scoped, tag = 'scoped memory for tpu_custom_call.1']
    #allocation5 [shape = 'u8[8192]{0}', space=vmem, size = 0x2000, scoped, tag = 'input window, operand 1, single buffered']
    #allocation6 [shape = 's32[1]{0}', space=sflag, size = 0x4, scoped, tag = 'scoped memory for tpu_custom_call.1']
    #allocation7 [shape = 'u8[4096]{0}', space=vmem, size = 0x1000, scoped, tag = 'output window, operand 0, single buffered']
    %7 = vsyncpa [#allocation3], 0
    %8 = vsyncpa [#allocation6], 0
    %9 = vsyncpa [#allocation4], 0
    // Predicated region
    $region2: #{tpu_custom_call.1} parent=1 // pred_check
      _
    $region3: #{tpu_custom_call.1} parent=1 // pred_check_branch
      %11 = sbr.rel (0) target = $region5
    $region4: #{tpu_custom_call.1} parent=1 // pred_region
      %s12 = sadd.s32 0, 0
      %p13 = scmp.lt.s32.totalorder %s12, 0
      %s14 = scalar_select %p13, %s12, 0
      %s15 = smul.u32 2, %s14
      %17 = vsyncadd [#allocation3], 0
      %s18 = smul.addr %s15, 8
      %s19 = scalar_lea.hbm %s0, %s18
      %s20 = sshll.u32 %s19, 4
      %s21 = int_to_ptr.hbm [resolvable:$true] %s20
      %s22 = sshll.u32 [#allocation2], 4
      %s23 = int_to_ptr.vmem [resolvable:$true] %s22
      %28 = dma.hbm_to_vmem [thread:$0]  %s21, 256, %s23, [#allocation3], 128, 128, 8
    $region5: #{tpu_custom_call.1} parent=1 // pred_fallthru
      _
    // Predicated region
    $region6: #{tpu_custom_call.1} parent=1 // pred_check
      _
    $region7: #{tpu_custom_call.1} parent=1 // pred_check_branch
      %30 = sbr.rel (0) target = $region9
    $region8: #{tpu_custom_call.1} parent=1 // pred_region
      %s31 = sadd.s32 0, 0
      %p32 = scmp.lt.s32.totalorder %s31, 0
      %s33 = scalar_select %p32, %s31, 0
      %s34 = smul.u32 2, %s33
      %36 = vsyncadd [#allocation6], 0
      %s37 = smul.addr %s34, 8
      %s38 = scalar_lea.hbm %s1, %s37
      %s39 = sshll.u32 %s38, 4
      %s40 = int_to_ptr.hbm [resolvable:$true] %s39
      %s41 = sshll.u32 [#allocation5], 4
      %s42 = int_to_ptr.vmem [resolvable:$true] %s41
      %47 = dma.hbm_to_vmem [thread:$0]  %s40, 256, %s42, [#allocation6], 128, 128, 8
    $region9: #{tpu_custom_call.1} parent=1 // pred_fallthru
      _
    // Predicated region
    $region10: #{tpu_custom_call.1} parent=1 // pred_check
      _
    $region11: #{tpu_custom_call.1} parent=1 // pred_check_branch
      %49 = sbr.rel (0) target = $region13
    $region12: #{tpu_custom_call.1} parent=1 // pred_region
      %51 = dma.done [#allocation3], 256
    $region13: #{tpu_custom_call.1} parent=1 // pred_fallthru
      _
    // Predicated region
    $region14: #{tpu_custom_call.1} parent=1 // pred_check
      _
    $region15: #{tpu_custom_call.1} parent=1 // pred_check_branch
      %53 = sbr.rel (0) target = $region17
    $region16: #{tpu_custom_call.1} parent=1 // pred_region
      %55 = dma.done [#allocation6], 256
    $region17: #{tpu_custom_call.1} parent=1 // pred_fallthru
      _
    %s56 = sadd.s32 0, 0
    %p57 = scmp.lt.s32.totalorder %s56, 0
    %s58 = scalar_select %p57, %s56, 0
    %s59 = smul.u32 2, %s58
    %s60 = sadd.s32 0, 0
    %p61 = scmp.lt.s32.totalorder %s60, 0
    %s62 = scalar_select %p61, %s60, 0
    %s63 = smul.u32 2, %s62
    %p64 = scmp.eq.s32.totalorder 0, 0
    // Predicated region
    $region18: #{tpu_custom_call.1} parent=1 // pred_check
      %p65 = pneg %p64
    $region19: #{tpu_custom_call.1} parent=1 // pred_check_branch
      %67 = sbr.rel (%p65) target = $region21
    $region20: #{tpu_custom_call.1} parent=1 // pred_region
      %68 = vst [vmem:[#allocation7] sm:$0xff] 0.0
    $region21: #{tpu_custom_call.1} parent=1 // pred_fallthru
      _
    %v69 = vld [vmem:[#allocation2] sm:$0xff]
    %v70 = vld [vmem:[#allocation2 + $0x8] sm:$0xff]
    %v71 = vld [vmem:[#allocation5] sm:$0xff]
    %v72 = vld [vmem:[#allocation5 + $0x8] sm:$0xff]
    %v73 = vmax.f32 %v69, 1e-07
    %v74 = vmax.f32 %v70, 1e-07
    %v75 = vmin.f32 %v73, 1.0
    %v76 = vmin.f32 %v74, 1.0
    %v77 = vlog2.pop %v75
    %v78 = vmul.f32 %v77, 0.6931472
    %v79 = vlog2.pop %v76
    %v80 = vmul.f32 %v79, 0.6931472
    %v81 = vmul.f32 %v71, %v78
    %v82 = vmul.f32 %v72, %v80
    %v83 = vld [vmem:[#allocation7] sm:$0xff]
    %v84 = vadd.f32 %v81, %v82
    %v85 = vadd.f32 %v83, %v84
    %86 = vst [vmem:[#allocation7] sm:$0xff] %v85
    // Predicated region
    $region22: #{tpu_custom_call.1} parent=1 // pred_check
      _
    $region23: #{tpu_custom_call.1} parent=1 // pred_check_branch
      %88 = sbr.rel (0) target = $region25
    $region24: #{tpu_custom_call.1} parent=1 // pred_region
      %90 = vsyncadd [#allocation4], 0
      %s92 = sshll.u32 [#allocation7], 4
      %s93 = int_to_ptr.vmem [resolvable:$true] %s92
      %s94 = sshll.u32 %s2, 4
      %s95 = int_to_ptr.hbm [resolvable:$true] %s94
      %97 = dma.vmem_to_hbm [thread:$0]  %s93, 128, %s95, [#allocation4]
    $region25: #{tpu_custom_call.1} parent=1 // pred_fallthru
      _
    // Predicated region
    $region26: #{tpu_custom_call.1} parent=1 // pred_check
      _
    $region27: #{tpu_custom_call.1} parent=1 // pred_check_branch
      %99 = sbr.rel (0) target = $region29
    $region28: #{tpu_custom_call.1} parent=1 // pred_region
      %101 = dma.done [#allocation4], 128
    $region29: #{tpu_custom_call.1} parent=1 // pred_fallthru
      _
    %102 = vsyncpa [#allocation3], 1
    %103 = vsyncpa [#allocation6], 1
    %104 = vsyncpa [#allocation4], 1

</llo_original>
